<compile_context>
chip_gen: v5e
topology: v5e:2x2
jax: 0.10.0
libtpu: 0.0.40
codegen_flags: <defaults>
</compile_context>

<pallas_src>
import math

import jax
import jax.numpy as jnp
from jax.experimental import pallas as pl
from jax.experimental.pallas import tpu as pltpu


def _normalize_kernel(x_ref, mean_ref, inv_std_ref, o_ref):
    # x_ref:       (tr, tc) VMEM tile, native dtype
    # mean_ref:    (1,  tc) f32 (broadcast over rows)
    # inv_std_ref: (1,  tc) f32 (broadcast over rows)
    x = x_ref[...].astype(jnp.float32)
    o_ref[...] = ((x - mean_ref[...]) * inv_std_ref[...]).astype(o_ref.dtype)


def _tile_target_bytes():
    """Per-buffer VMEM tile target, chosen per TPU generation."""
    try:
        kind = jax.devices()[0].device_kind.lower()
    except Exception:
        kind = ""
    if "v4" in kind or "v5" in kind:
        # v5e: ~0.8 TB/s HBM and a 16 MiB default scoped-VMEM floor. 2 MiB/buffer
        # keeps per-step overhead <10% and 2x(in)+2x(out) at ~8 MiB.
        return 2 << 20
    if "v6" in kind:
        return 3 << 20
    # v7x / newer: ~3.2 TB/s HBM makes the ~0.35 us per-step overhead a 20%+ tax
    # on small tiles; ~5 MiB/buffer amortizes it while 2*(in+out) ~ 20 MiB still
    # fits comfortably in 64 MiB physical VMEM.
    return 5 << 20


def _launch(xf, mean_row, inv_row, out_dtype, block_rows=None, block_cols=None):
    """Run the kernel on a 2-D (Bf, Df) view with matching (1, Df) f32 params."""
    Bf, Df = xf.shape
    in_itemsize = jnp.dtype(xf.dtype).itemsize
    out_itemsize = jnp.dtype(out_dtype).itemsize
    # Packed-sublane multiple of the I/O dtype (8 f32, 16 bf16, 32 int8/fp8) so
    # every sublane store of a full tile is unmasked.
    sub = max(8, 32 // max(min(in_itemsize, out_itemsize), 1))

    auto_rows = block_rows is None
    target = _tile_target_bytes()
    # dtype-aware per-buffer element budget (not a hard-coded 4 bytes/elem).
    tile_elems = max(sub * 128, target // max(in_itemsize, out_itemsize))

    # ---- column tiling: bounds VMEM independently of Df ----------------------
    if block_cols is None:
        if Df <= max(128, tile_elems // sub):
            block_cols = Df                                    # full width
        else:
            block_cols = max(128, ((tile_elems // sub) // 128) * 128)
    block_cols = min(block_cols, Df)
    n_col_blocks = pl.cdiv(Df, block_cols)

    # ---- row tiling ----------------------------------------------------------
    if block_rows is None:
        block_rows = max(sub, ((tile_elems // max(block_cols, 1)) // sub) * sub)
    block_rows = min(block_rows, Bf)
    if block_rows < Bf:
        block_rows = max(sub, (block_rows // sub) * sub)
    n_row_blocks = pl.cdiv(Bf, block_rows)

    # ---- megacore: ensure >= ~4 grid steps so both v7x TensorCores get work --
    min_steps = 4
    if auto_rows and n_row_blocks * n_col_blocks < min_steps and Bf > sub:
        want_rb = pl.cdiv(min_steps, n_col_blocks)
        cand = max(sub, pl.cdiv(pl.cdiv(Bf, want_rb), sub) * sub)
        if cand < block_rows:
            block_rows = cand
            n_row_blocks = pl.cdiv(Bf, block_rows)

    # ---- explicit scoped-VMEM budget: 2x(in) + 2x(out) + 2x2 param rows ------
    in_tile = block_rows * block_cols * in_itemsize
    out_tile = block_rows * block_cols * out_itemsize
    param_tile = block_cols * 4
    needed = 2 * (in_tile + out_tile) + 4 * param_tile
    vmem_limit = int(min(max(needed + (4 << 20), 16 << 20), 40 << 20))

    # Grid: columns outer, rows inner. The param blocks' index (0, j) is constant
    # across the inner row loop, so they are DMA'd once per column block.
    grid = (n_col_blocks, n_row_blocks)

    return pl.pallas_call(
        _normalize_kernel,
        out_shape=jax.ShapeDtypeStruct((Bf, Df), out_dtype),
        grid_spec=pl.GridSpec(
            grid=grid,
            in_specs=[
                pl.BlockSpec((block_rows, block_cols), lambda j, i: (i, j)),
                pl.BlockSpec((1, block_cols), lambda j, i: (0, j)),
                pl.BlockSpec((1, block_cols), lambda j, i: (0, j)),
            ],
            out_specs=pl.BlockSpec((block_rows, block_cols), lambda j, i: (i, j)),
        ),
        compiler_params=pltpu.CompilerParams(
            dimension_semantics=("parallel", "parallel"),
            vmem_limit_bytes=vmem_limit,
        ),
    )(xf, mean_row, inv_row)


def normalizer_forward(x, mean, std, epsilon=1e-6, block_rows=None, block_cols=None):
    """Pallas equivalent of Normalizer.forward: (x - mean) / (std + epsilon)."""
    orig_shape = x.shape
    D = orig_shape[-1]
    assert mean.shape == (D,)
    assert std.shape == (D,)
    B = 1
    for s in orig_shape[:-1]:
        B *= s
    x2 = x.reshape(B, D)
    out_dtype = x.dtype

    # Per-feature params in f32 (tiny O(D) XLA ops outside the kernel).
    mean32 = mean.astype(jnp.float32)
    inv_std32 = 1.0 / (std.astype(jnp.float32) + jnp.float32(epsilon))

    # Lane-dense fold: view (B, D) as (B//k, k*D), k*D % 128 == 0 (free reshape).
    k = 1
    if D % 128 != 0 and B > 1:
        kc = 128 // math.gcd(D, 128)
        if B % kc == 0:
            k = kc
        elif B > kc and D < 128:
            # Narrow, non-128-multiple lanes: masked partial-lane stores dominate,
            # so keep >95% of rows on the lane-dense fast path (folded main chunk)
            # and handle the small remainder with a second, unfolded launch. The
            # extra concatenate pass is cheap at this width.
            B_main = (B // kc) * kc
            out_main = normalizer_forward(x2[:B_main], mean, std, epsilon)
            out_tail = normalizer_forward(x2[B_main:], mean, std, epsilon)
            return jnp.concatenate([out_main, out_tail], axis=0).reshape(orig_shape)

    Bf, Df = B // k, D * k
    xf = x2.reshape(Bf, Df)
    mean_row = (jnp.tile(mean32, (k,)) if k > 1 else mean32).reshape(1, Df)
    inv_row = (jnp.tile(inv_std32, (k,)) if k > 1 else inv_std32).reshape(1, Df)

    out = _launch(xf, mean_row, inv_row, out_dtype, block_rows, block_cols)
    return out.reshape(orig_shape)


def normalizer_forward_ref(x, mean, std, epsilon=1e-6):
    """Pure-JAX reference matching the PyTorch forward."""
    x32 = x.astype(jnp.float32)
    out = (x32 - mean[None, :]) / (std[None, :] + epsilon)
    return out.astype(x.dtype)


if __name__ == "__main__":
    key = jax.random.PRNGKey(0)
    k_fit, k_x, k_x2, k_x3, k_x4, k_x5 = jax.random.split(key, 6)

    batch, dim = 8, 32
    epsilon = 1e-6

    # Deterministically "fit" the buffers in plain JAX (mirrors Normalizer.fit):
    # per-feature mean, Bessel-corrected std, small stds clamped to 1.0.
    X_fit = jax.random.normal(k_fit, (64, dim), dtype=jnp.float32) * 2.0 + 0.5
    mean = jnp.mean(X_fit, axis=0)
    std = jnp.std(X_fit, axis=0, ddof=1)
    std = jnp.where(std < 1e-6, 1.0, std)

    # --- Test 1: small f32 case, lane-dense fold (D=32 -> k=4, Df=128) ---------
    x = jax.random.normal(k_x, (batch, dim), dtype=jnp.float32)
    out = jax.block_until_ready(normalizer_forward(x, mean, std, epsilon))
    ref = normalizer_forward_ref(x, mean, std, epsilon)
    assert out.shape == (batch, dim) and out.dtype == jnp.float32
    assert jnp.allclose(out, ref, rtol=1e-5, atol=1e-5)

    # --- Test 2: ragged row grid (cdiv + clamped last tile) --------------------
    D2 = 128
    mean2 = jnp.linspace(-1.0, 1.0, D2, dtype=jnp.float32)
    std2 = jnp.linspace(0.5, 2.0, D2, dtype=jnp.float32)
    x2 = jax.random.normal(k_x2, (40, D2), dtype=jnp.float32)
    out2 = jax.block_until_ready(
        normalizer_forward(x2, mean2, std2, epsilon, block_rows=16)
    )
    ref2 = normalizer_forward_ref(x2, mean2, std2, epsilon)
    assert jnp.allclose(out2, ref2, rtol=1e-5, atol=1e-5)

    # --- Test 3: bf16 in/out (f32 math in-register, 16-row sublane packing) ----
    x3 = jax.random.normal(k_x3, (64, dim), dtype=jnp.bfloat16)
    out3 = jax.block_until_ready(normalizer_forward(x3, mean, std, epsilon))
    ref3 = normalizer_forward_ref(x3, mean, std, epsilon)
    assert out3.dtype == jnp.bfloat16
    assert jnp.allclose(
        out3.astype(jnp.float32), ref3.astype(jnp.float32), rtol=2e-2, atol=2e-2
    )

    # --- Test 4: forced 2-D (columns x rows) grid ------------------------------
    D4 = 256
    mean4 = jnp.linspace(-2.0, 2.0, D4, dtype=jnp.float32)
    std4 = jnp.linspace(0.5, 1.5, D4, dtype=jnp.float32)
    x4 = jax.random.normal(k_x4, (32, D4), dtype=jnp.float32)
    out4 = jax.block_until_ready(
        normalizer_forward(x4, mean4, std4, epsilon, block_cols=128)
    )
    ref4 = normalizer_forward_ref(x4, mean4, std4, epsilon)
    assert jnp.allclose(out4, ref4, rtol=1e-5, atol=1e-5)

    # --- Test 5: narrow D with B not divisible by the fold factor (main + tail)
    x5 = jax.random.normal(k_x5, (10, dim), dtype=jnp.float32)
    out5 = jax.block_until_ready(normalizer_forward(x5, mean, std, epsilon))
    ref5 = normalizer_forward_ref(x5, mean, std, epsilon)
    assert out5.shape == (10, dim)
    assert jnp.allclose(out5, ref5, rtol=1e-5, atol=1e-5)

    print("KERNEL_OK")
</pallas_src>

<mosaic_0001>
module attributes {stable_mosaic.version = 11 : i64} {
  func.func @_normalize_kernel(%arg0: i32, %arg1: i32, %arg2: memref<2x128xf32, #tpu.memory_space<vmem>>, %arg3: memref<1x128xf32, #tpu.memory_space<vmem>>, %arg4: memref<1x128xf32, #tpu.memory_space<vmem>>, %arg5: memref<2x128xf32, #tpu.memory_space<vmem>>) attributes {dimension_semantics = [#tpu.dimension_semantics<parallel>, #tpu.dimension_semantics<parallel>], iteration_bounds = array<i64: 1, 1>, scalar_prefetch = 0 : i64, scratch_operands = 0 : i64, tpu.core_type = #tpu.core_type<tc>, window_params = [{transform_indices = @transform_0, window_bounds = array<i64: 2, 128>}, {transform_indices = @transform_1, window_bounds = array<i64: 1, 128>}, {transform_indices = @transform_2, window_bounds = array<i64: 1, 128>}, {transform_indices = @transform_3, window_bounds = array<i64: 2, 128>}]} {
    %c0 = arith.constant 0 : index
    %c0_0 = arith.constant 0 : index
    %0 = vector.load %arg2[%c0, %c0_0] : memref<2x128xf32, #tpu.memory_space<vmem>>, vector<2x128xf32>
    %c0_1 = arith.constant 0 : index
    %c0_2 = arith.constant 0 : index
    %1 = vector.load %arg3[%c0_1, %c0_2] : memref<1x128xf32, #tpu.memory_space<vmem>>, vector<1x128xf32>
    %2 = vector.broadcast %1 : vector<1x128xf32> to vector<2x128xf32>
    %3 = arith.subf %0, %2 : vector<2x128xf32>
    %c0_3 = arith.constant 0 : index
    %c0_4 = arith.constant 0 : index
    %4 = vector.load %arg4[%c0_3, %c0_4] : memref<1x128xf32, #tpu.memory_space<vmem>>, vector<1x128xf32>
    %5 = vector.broadcast %4 : vector<1x128xf32> to vector<2x128xf32>
    %6 = arith.mulf %3, %5 : vector<2x128xf32>
    %c0_5 = arith.constant 0 : index
    %c0_6 = arith.constant 0 : index
    %7 = vector.load %arg5[%c0_5, %c0_6] : memref<2x128xf32, #tpu.memory_space<vmem>>, vector<2x128xf32>
    tpu.vector_store %arg5[%c0_5, %c0_6], %6 {strides = array<i32>} : memref<2x128xf32, #tpu.memory_space<vmem>>, vector<2x128xf32>,
    return
  }
  func.func @transform_0(%arg0: i32, %arg1: i32) -> (i32, i32) {
    %c0_i32 = arith.constant 0 : i32
    return %arg1, %arg0 : i32, i32
  }
  func.func @transform_1(%arg0: i32, %arg1: i32) -> (i32, i32) {
    %c0_i32 = arith.constant 0 : i32
    %c0_i32_0 = arith.constant 0 : i32
    return %c0_i32, %arg0 : i32, i32
  }
  func.func @transform_2(%arg0: i32, %arg1: i32) -> (i32, i32) {
    %c0_i32 = arith.constant 0 : i32
    %c0_i32_0 = arith.constant 0 : i32
    return %c0_i32, %arg0 : i32, i32
  }
  func.func @transform_3(%arg0: i32, %arg1: i32) -> (i32, i32) {
    %c0_i32 = arith.constant 0 : i32
    return %arg1, %arg0 : i32, i32
  }
}

</mosaic_0001>

<llo_original>
// kernel: tpu_custom_call.1
$region0: #{tpu_custom_call.1}
  #allocation0 [shape = 'u32[]', space=smem, size = 0x4, offset = 0x4, fixed_abs, tag = 'smem constant byte address 0x4 - core index']
  #allocation1 [shape = 'u32[72,128]{1,0:T(1,128)}', space=vmem, size = 0x9000, scoped, tag = 'internal scratch']
  %s0 = inlined_call_operand.hbm [shape: f32[2,128], index: 0, kind: input, shape index: {}]
  %s1 = inlined_call_operand.hbm [shape: f32[1,128], index: 1, kind: input, shape index: {}]
  %s2 = inlined_call_operand.vmem [shape: f32[1,128], index: 2, kind: input, shape index: {}]
  %s3 = inlined_call_operand.hbm [shape: f32[2,128], index: 3, kind: output, shape index: {}]
  %s4 = sld [smem:[#allocation0]]
  $region30: #{tpu_custom_call.1} parent=0
    _
  %s6 = ssub.s32 1, %s4
  %s7 = scalar_select 0, %s6, %s4
  $region1: #{tpu_custom_call.1} parent=0
    #allocation2 [shape = 'u8[1024]{0}', space=vmem, size = 0x400, scoped, tag = 'input window, operand 0, single buffered']
    #allocation3 [shape = 's32[1]{0}', space=sflag, size = 0x4, scoped, tag = 'scoped memory for tpu_custom_call.1']
    #allocation4 [shape = 's32[1]{0}', space=sflag, size = 0x4, scoped, tag = 'scoped memory for tpu_custom_call.1']
    #allocation5 [shape = 'u8[512]{0}', space=vmem, size = 0x400, scoped, tag = 'input window, operand 1, single buffered']
    #allocation6 [shape = 's32[1]{0}', space=sflag, size = 0x4, scoped, tag = 'scoped memory for tpu_custom_call.1']
    #allocation7 [shape = 'u8[1024]{0}', space=vmem, size = 0x400, scoped, tag = 'output window, operand 0, single buffered']
    %8 = vsyncpa [#allocation3], 0
    %9 = vsyncpa [#allocation6], 0
    %10 = vsyncpa [#allocation4], 0
    // Predicated region
    $region2: #{tpu_custom_call.1} parent=1 // pred_check
      _
    $region3: #{tpu_custom_call.1} parent=1 // pred_check_branch
      %12 = sbr.rel (0) target = $region5
    $region4: #{tpu_custom_call.1} parent=1 // pred_region
      %14 = vsyncadd [#allocation3], 0
      %s16 = sshll.u32 %s0, 4
      %s17 = int_to_ptr.hbm [resolvable:$true] %s16
      %s18 = sshll.u32 [#allocation2], 4
      %s19 = int_to_ptr.vmem [resolvable:$true] %s18
      %21 = dma.hbm_to_vmem [thread:$0]  %s17, 32, %s19, [#allocation3]
    $region5: #{tpu_custom_call.1} parent=1 // pred_fallthru
      _
    // Predicated region
    $region6: #{tpu_custom_call.1} parent=1 // pred_check
      _
    $region7: #{tpu_custom_call.1} parent=1 // pred_check_branch
      %23 = sbr.rel (0) target = $region9
    $region8: #{tpu_custom_call.1} parent=1 // pred_region
      %25 = vsyncadd [#allocation6], 0
      %s27 = sshll.u32 %s1, 4
      %s28 = int_to_ptr.hbm [resolvable:$true] %s27
      %s29 = sshll.u32 [#allocation5], 4
      %s30 = int_to_ptr.vmem [resolvable:$true] %s29
      %32 = dma.hbm_to_vmem [thread:$0]  %s28, 16, %s30, [#allocation6]
    $region9: #{tpu_custom_call.1} parent=1 // pred_fallthru
      _
    // Predicated region
    $region10: #{tpu_custom_call.1} parent=1 // pred_check
      _
    $region11: #{tpu_custom_call.1} parent=1 // pred_check_branch
      %34 = sbr.rel (0) target = $region13
    $region12: #{tpu_custom_call.1} parent=1 // pred_region
      _
    $region13: #{tpu_custom_call.1} parent=1 // pred_fallthru
      _
    // Predicated region
    $region14: #{tpu_custom_call.1} parent=1 // pred_check
      _
    $region15: #{tpu_custom_call.1} parent=1 // pred_check_branch
      %36 = sbr.rel (0) target = $region17
    $region16: #{tpu_custom_call.1} parent=1 // pred_region
      %38 = dma.done [#allocation3], 32
    $region17: #{tpu_custom_call.1} parent=1 // pred_fallthru
      _
    // Predicated region
    $region18: #{tpu_custom_call.1} parent=1 // pred_check
      _
    $region19: #{tpu_custom_call.1} parent=1 // pred_check_branch
      %40 = sbr.rel (0) target = $region21
    $region20: #{tpu_custom_call.1} parent=1 // pred_region
      %42 = dma.done [#allocation6], 16
    $region21: #{tpu_custom_call.1} parent=1 // pred_fallthru
      _
    %v43 = vld [vmem:[#allocation2] sm:$0x3]
    %v44 = vld [vmem:[#allocation5] sm:$0x1]
    %v46 = vperm.slane %v44, 0
    %v48 = vsub.f32 %v43, %v46
    %v49 = vld [vmem:[%s2] sm:$0x1]
    %v51 = vperm.slane %v49, 0
    %v53 = vmul.f32 %v48, %v51
    %54 = vst [vmem:[#allocation7] sm:$0x3] %v53
    // Predicated region
    $region22: #{tpu_custom_call.1} parent=1 // pred_check
      _
    $region23: #{tpu_custom_call.1} parent=1 // pred_check_branch
      %56 = sbr.rel (0) target = $region25
    $region24: #{tpu_custom_call.1} parent=1 // pred_region
      %58 = vsyncadd [#allocation4], 0
      %s60 = sshll.u32 [#allocation7], 4
      %s61 = int_to_ptr.vmem [resolvable:$true] %s60
      %s62 = sshll.u32 %s3, 4
      %s63 = int_to_ptr.hbm [resolvable:$true] %s62
      %65 = dma.vmem_to_hbm [thread:$0]  %s61, 32, %s63, [#allocation4]
    $region25: #{tpu_custom_call.1} parent=1 // pred_fallthru
      _
    // Predicated region
    $region26: #{tpu_custom_call.1} parent=1 // pred_check
      _
    $region27: #{tpu_custom_call.1} parent=1 // pred_check_branch
      %67 = sbr.rel (0) target = $region29
    $region28: #{tpu_custom_call.1} parent=1 // pred_region
      %69 = dma.done [#allocation4], 32
    $region29: #{tpu_custom_call.1} parent=1 // pred_fallthru
      _
    %70 = vsyncpa [#allocation3], 1
    %71 = vsyncpa [#allocation6], 1
    %72 = vsyncpa [#allocation4], 1

</llo_original>
